<compile_context>
chip_gen: v5e
topology: v5e:2x2
jax: 0.10.0
libtpu: 0.0.40
codegen_flags: <defaults>
</compile_context>

<pallas_src>
import jax
import jax.numpy as jnp
from jax import lax
from jax.experimental import pallas as pl
from jax.experimental.pallas import tpu as pltpu

_LANES = 128


def _round_up(x, m):
    return ((x + m - 1) // m) * m


def _sublane_multiple(itemsize):
    # Native VMEM tiling: (8,128) for 4-byte, (16,128) for 2-byte, (32,128) for 1-byte.
    return {1: 32, 2: 16, 4: 8}.get(int(itemsize), 8)


def _tpu_vmem_bytes():
    """Trace-time VMEM capacity query; conservative fallback if unavailable."""
    try:
        info = pltpu.get_tpu_info()
        cap = getattr(info, "vmem_capacity_bytes", None)
        if cap:
            return int(cap)
    except Exception:
        pass
    return 64 * 2 ** 20  # assume v7x-class per-TensorCore VMEM when unknown


def _pick_tiling(B, T, logit_dtype, s_dtype):
    """Return (batch_tile, vmem_limit_bytes), generation-aware."""
    vmem_cap = _tpu_vmem_bytes()
    if vmem_cap <= 80 * 2 ** 20:        # v7x-class: 64 MiB VMEM per TC
        vmem_limit = 48 * 2 ** 20
    else:                               # v5e / v6e: 128 MiB physical VMEM
        vmem_limit = 96 * 2 ** 20

    # Budget the WHOLE double-buffered working set against the limit we
    # request, leaving headroom for Mosaic internal scratch and the
    # (1,1,128) f32 output double-buffer.
    budget = (3 * vmem_limit) // 4 - (1 << 20)

    l_bytes = jnp.dtype(logit_dtype).itemsize
    s_bytes = jnp.dtype(s_dtype).itemsize
    # Per batch-row bytes, double-buffered: logit + s dense streams,
    # the int32 t column and the packed f32 [d, p_t] column.
    per_row = 2 * (T * (l_bytes + s_bytes) + 4 + 8)

    sub = max(_sublane_multiple(l_bytes), _sublane_multiple(s_bytes))
    max_tb = max(sub, (budget // per_row) // sub * sub)
    bp0 = _round_up(B, sub)
    tb = min(bp0, max_tb)

    # v7x has two TensorCores; a 1-step grid would leave one idle.  Splitting
    # a single tile into two costs only ~0.35 us on 1-TC chips, so do it
    # whenever the batch allows.
    if tb >= bp0 and bp0 >= 2 * sub:
        tb = _round_up(-(-bp0 // 2), sub)
    return tb, vmem_limit


# --------------------------------------------------------------------------
# Fused kernel: one batch-tile -> one (1, 1, 128) row of partial sums.
#   loss 1 (BCE): y[b,j] = d[b] * (j >= t[b]);  per = s * (softplus(x) - y*x)
#   loss 2 (NLL): p_t gathered in the wrapper;  nll = -d * log(p_t + eps)
# --------------------------------------------------------------------------
def _fused_loss_kernel(logit_ref, s_ref, t_ref, aux_ref, out_ref):
    logit = logit_ref[...].astype(jnp.float32)      # (tb, T)
    s = s_ref[...].astype(jnp.float32)              # (tb, T) mask
    t = t_ref[...]                                  # (tb, 1) i32
    aux = aux_ref[...]                              # (tb, 2) f32: [d, p_t]
    d = aux[:, 0:1]
    p_t = aux[:, 1:2]

    tb, T = logit.shape
    col = lax.broadcasted_iota(jnp.int32, (tb, T), 1)

    # ---- masked survival BCE-with-logits (cumulative labels) ----
    y = jnp.where(col >= t, 1.0, 0.0) * d
    sp = jnp.maximum(logit, 0.0) + jnp.log1p(jnp.exp(-jnp.abs(logit)))
    per = s * (sp - y * logit)

    # ---- pmf NLL at event time (gather already done in the wrapper) ----
    nll = -d * jnp.log(p_t + 1e-8)

    # ---- pack partial sums into a lane-dense row ----
    lane = lax.broadcasted_iota(jnp.int32, (1, 1, _LANES), 2)
    out_ref[...] = (jnp.where(lane == 0, jnp.sum(per), 0.0)
                    + jnp.where(lane == 1, jnp.sum(s), 0.0)
                    + jnp.where(lane == 2, jnp.sum(nll), 0.0)
                    + jnp.where(lane == 3, jnp.sum(d), 0.0))


def fused_survival_losses(logit, pmf, s, t, d):
    """Single pallas_call computing both losses; returns jnp array [bce, nll]."""
    B, T = logit.shape
    t = t.astype(jnp.int32)
    d = d.astype(jnp.float32)

    # Hoist the per-row pmf gather: the NLL needs one element per row, so the
    # full (B, T) pmf never enters the kernel's HBM->VMEM stream.
    p_t = jnp.take_along_axis(pmf.astype(jnp.float32), t, axis=1)     # (B, 1)
    aux = jnp.concatenate([d, p_t], axis=1)                           # (B, 2)

    tb, vmem_limit = _pick_tiling(B, T, logit.dtype, s.dtype)
    Bp = _round_up(B, tb)
    if Bp != B:
        # Zero padding is exact: padded rows have s == 0 and d == 0, so they
        # contribute 0 to every partial sum (numerators and denominators).
        pad = ((0, Bp - B), (0, 0))
        logit = jnp.pad(logit, pad)
        s = jnp.pad(s, pad)
        t = jnp.pad(t, pad)
        aux = jnp.pad(aux, pad)

    grid = (Bp // tb,)
    # NOTE: pipeline_mode=pl.Buffered(3) on the dense specs is a further
    # tunable when T is small; default double-buffering is kept here.
    dense = pl.BlockSpec((tb, T), lambda b: (b, 0))
    col_t = pl.BlockSpec((tb, 1), lambda b: (b, 0))
    col_aux = pl.BlockSpec((tb, 2), lambda b: (b, 0))

    partials = pl.pallas_call(
        _fused_loss_kernel,
        out_shape=jax.ShapeDtypeStruct((grid[0], 1, _LANES), jnp.float32),
        grid_spec=pltpu.PrefetchScalarGridSpec(
            num_scalar_prefetch=0,
            grid=grid,
            in_specs=[dense, dense, col_t, col_aux],
            out_specs=pl.BlockSpec((1, 1, _LANES), lambda b: (b, 0, 0)),
        ),
        compiler_params=pltpu.CompilerParams(
            dimension_semantics=("parallel",),
            vmem_limit_bytes=vmem_limit,
        ),
    )(logit, s, t, aux)

    sums = jnp.sum(partials, axis=(0, 1))                             # (128,)
    bce = sums[0] / jnp.maximum(sums[1], 1.0)
    nll = sums[2] / jnp.maximum(sums[3], 1.0)
    return jnp.stack([bce, nll])


# --------------------------------------------------------------------------
# Registered loss functions. Both are served by the SAME fused kernel; the
# aggregator detects the shared `fused_group` so the kernel is launched once
# per forward even though two losses are registered.
# --------------------------------------------------------------------------
def _make_fused_loss(index):
    def loss_fn(logit, pmf, s, t, d):
        return fused_survival_losses(logit, pmf, s, t, d)[index]
    loss_fn.fused_group = fused_survival_losses
    loss_fn.fused_index = index
    return loss_fn


survival_bce_loss = _make_fused_loss(0)
pmf_nll_loss = _make_fused_loss(1)


# --------------------------------------------------------------------------
# The aggregator: same semantics as the PyTorch module (list of .item() floats)
# but all losses are dispatched inside ONE jit and fetched with ONE host sync.
# --------------------------------------------------------------------------
class LossAggregator:
    def __init__(self):
        self.loss_functions = []
        self._compiled = None

    def add_loss(self, loss_function):
        self.loss_functions.append(loss_function)
        self._compiled = None  # invalidate the compiled stacked computation

    def _build(self):
        fns = tuple(self.loss_functions)

        def compute_all(logit, pmf, s, t, d):
            cache = {}
            outs = []
            for fn in fns:
                group = getattr(fn, "fused_group", None)
                if group is not None:
                    key = id(group)
                    if key not in cache:          # fused kernel runs once
                        cache[key] = group(logit, pmf, s, t, d)
                    outs.append(cache[key][fn.fused_index])
                else:                              # arbitrary user loss fn
                    outs.append(fn(logit, pmf, s, t, d))
            return jnp.stack(outs)

        self._compiled = jax.jit(compute_all)

    def forward(self, logit, pmf, s, t, d):
        if self._compiled is None:
            self._build()
        stacked = self._compiled(logit, pmf, s, t, d)
        # `.item()` per loss in the reference -> a single device->host
        # transfer here (one sync for all losses), then plain Python floats.
        return jax.device_get(jax.block_until_ready(stacked)).tolist()

    __call__ = forward


# --------------------------------------------------------------------------
# Pure-JAX reference (matches the PyTorch losses the module aggregates).
# --------------------------------------------------------------------------
def _reference(logit, pmf, s, t, d):
    logit = logit.astype(jnp.float32)
    s = s.astype(jnp.float32)
    d = d.astype(jnp.float32)
    t = t.astype(jnp.int32)
    T = logit.shape[1]
    col = jnp.arange(T, dtype=jnp.int32)[None, :]
    y = jnp.where(col >= t, 1.0, 0.0) * d
    sp = jnp.maximum(logit, 0.0) + jnp.log1p(jnp.exp(-jnp.abs(logit)))
    bce = jnp.sum(s * (sp - y * logit)) / jnp.maximum(jnp.sum(s), 1.0)
    p_t = jnp.take_along_axis(pmf.astype(jnp.float32), t, axis=1)
    nll = jnp.sum(-d * jnp.log(p_t + 1e-8)) / jnp.maximum(jnp.sum(d), 1.0)
    return float(bce), float(nll)


if __name__ == "__main__":
    B, T = 8, 128  # one (8,128) vreg tile per dense input

    key = jax.random.PRNGKey(0)
    k1, k2, k3, k4, k5 = jax.random.split(key, 5)

    logit = jax.random.normal(k1, (B, T), dtype=jnp.float32)
    pmf_raw = jax.random.uniform(k2, (B, T), dtype=jnp.float32) + 1e-3
    pmf = pmf_raw / jnp.sum(pmf_raw, axis=1, keepdims=True)          # (B, T) pmf
    s = (jax.random.uniform(k3, (B, T)) > 0.2).astype(jnp.float32)   # mask
    t = jax.random.randint(k4, (B, 1), 0, T, dtype=jnp.int32)        # event time
    d = (jax.random.uniform(k5, (B, 1)) > 0.5).astype(jnp.float32)   # event ind.

    agg = LossAggregator()
    agg.add_loss(survival_bce_loss)
    agg.add_loss(pmf_nll_loss)

    losses = agg(logit, pmf, s, t, d)
    assert isinstance(losses, list) and len(losses) == 2
    assert all(isinstance(v, float) for v in losses)

    ref_bce, ref_nll = _reference(logit, pmf, s, t, d)
    assert abs(losses[0] - ref_bce) < 1e-4
    assert abs(losses[1] - ref_nll) < 1e-4

    # ---- padding / multi-tile path (batch not a multiple of the tile) ----
    B2 = 11
    logit2 = jax.random.normal(k1, (B2, T), dtype=jnp.float32)
    pmf2 = jax.random.uniform(k2, (B2, T), dtype=jnp.float32) + 1e-3
    pmf2 = pmf2 / jnp.sum(pmf2, axis=1, keepdims=True)
    s2 = (jax.random.uniform(k3, (B2, T)) > 0.2).astype(jnp.float32)
    t2 = jax.random.randint(k4, (B2, 1), 0, T, dtype=jnp.int32)
    d2 = (jax.random.uniform(k5, (B2, 1)) > 0.5).astype(jnp.float32)
    both2 = jax.block_until_ready(fused_survival_losses(logit2, pmf2, s2, t2, d2))
    ref_bce2, ref_nll2 = _reference(logit2, pmf2, s2, t2, d2)
    assert abs(float(both2[0]) - ref_bce2) < 1e-4
    assert abs(float(both2[1]) - ref_nll2) < 1e-4

    # ---- narrow-dtype path: bf16 logits + int8 mask (byte-reduction path) ----
    B3 = 20
    logit3 = jax.random.normal(k1, (B3, T), dtype=jnp.float32).astype(jnp.bfloat16)
    pmf3 = jax.random.uniform(k2, (B3, T), dtype=jnp.float32) + 1e-3
    pmf3 = pmf3 / jnp.sum(pmf3, axis=1, keepdims=True)
    s3 = (jax.random.uniform(k3, (B3, T)) > 0.2).astype(jnp.int8)
    t3 = jax.random.randint(k4, (B3, 1), 0, T, dtype=jnp.int32)
    d3 = (jax.random.uniform(k5, (B3, 1)) > 0.5).astype(jnp.float32)
    both3 = jax.block_until_ready(fused_survival_losses(logit3, pmf3, s3, t3, d3))
    ref_bce3, ref_nll3 = _reference(logit3, pmf3, s3, t3, d3)
    assert abs(float(both3[0]) - ref_bce3) < 1e-4
    assert abs(float(both3[1]) - ref_nll3) < 1e-4

    print("KERNEL_OK")
</pallas_src>

<mosaic_0001>
module attributes {stable_mosaic.version = 11 : i64} {
  func.func @_fused_loss_kernel(%arg0: i32, %arg1: memref<8x128xf32, #tpu.memory_space<vmem>>, %arg2: memref<8x128xf32, #tpu.memory_space<vmem>>, %arg3: memref<8x1xi32, #tpu.memory_space<vmem>>, %arg4: memref<8x2xf32, #tpu.memory_space<vmem>>, %arg5: memref<1x1x128xf32, #tpu.memory_space<vmem>>) attributes {dimension_semantics = [#tpu.dimension_semantics<parallel>], iteration_bounds = array<i64: 1>, scalar_prefetch = 0 : i64, scratch_operands = 0 : i64, tpu.core_type = #tpu.core_type<tc>, window_params = [{transform_indices = @transform_0, window_bounds = array<i64: 8, 128>}, {transform_indices = @transform_1, window_bounds = array<i64: 8, 128>}, {transform_indices = @transform_2, window_bounds = array<i64: 8, 1>}, {transform_indices = @transform_3, window_bounds = array<i64: 8, 2>}, {transform_indices = @transform_4, window_bounds = array<i64: 1, 1, 128>}]} {
    %c0 = arith.constant 0 : index
    %c0_0 = arith.constant 0 : index
    %0 = vector.load %arg1[%c0, %c0_0] : memref<8x128xf32, #tpu.memory_space<vmem>>, vector<8x128xf32>
    %c0_1 = arith.constant 0 : index
    %c0_2 = arith.constant 0 : index
    %1 = vector.load %arg2[%c0_1, %c0_2] : memref<8x128xf32, #tpu.memory_space<vmem>>, vector<8x128xf32>
    %c0_3 = arith.constant 0 : index
    %c0_4 = arith.constant 0 : index
    %2 = vector.load %arg3[%c0_3, %c0_4] : memref<8x1xi32, #tpu.memory_space<vmem>>, vector<8x1xi32>
    %c0_5 = arith.constant 0 : index
    %c0_6 = arith.constant 0 : index
    %3 = vector.load %arg4[%c0_5, %c0_6] : memref<8x2xf32, #tpu.memory_space<vmem>>, vector<8x2xf32>
    %4 = vector.extract_strided_slice %3 {offsets = [0, 0], sizes = [8, 1], strides = [1, 1]} : vector<8x2xf32> to vector<8x1xf32>
    %5 = vector.extract_strided_slice %3 {offsets = [0, 1], sizes = [8, 1], strides = [1, 1]} : vector<8x2xf32> to vector<8x1xf32>
    %6 = tpu.iota {dimensions = array<i32: 1>} : vector<8x128xi32>
    %7 = vector.broadcast %2 : vector<8x1xi32> to vector<8x128xi32>
    %8 = arith.cmpi sge, %6, %7 : vector<8x128xi32>
    %cst = arith.constant 1.000000e+00 : f32
    %cst_7 = arith.constant 0.000000e+00 : f32
    %9 = vector.broadcast %cst : f32 to vector<8x128xf32>
    %10 = vector.broadcast %cst_7 : f32 to vector<8x128xf32>
    %11 = arith.select %8, %9, %10 : vector<8x128xi1>, vector<8x128xf32>
    %12 = vector.broadcast %4 : vector<8x1xf32> to vector<8x128xf32>
    %13 = arith.mulf %11, %12 : vector<8x128xf32>
    %cst_8 = arith.constant 0.000000e+00 : f32
    %14 = vector.broadcast %cst_8 : f32 to vector<8x128xf32>
    %15 = arith.maximumf %0, %14 : vector<8x128xf32>
    %16 = math.absf %0 : vector<8x128xf32>
    %cst_9 = arith.constant 0.000000e+00 : f32
    %17 = vector.broadcast %cst_9 : f32 to vector<8x128xf32>
    %18 = arith.subf %17, %16 : vector<8x128xf32>
    %19 = math.exp %18 : vector<8x128xf32>
    %20 = math.log1p %19 : vector<8x128xf32>
    %21 = arith.addf %15, %20 : vector<8x128xf32>
    %22 = arith.mulf %13, %0 : vector<8x128xf32>
    %23 = arith.subf %21, %22 : vector<8x128xf32>
    %24 = arith.mulf %1, %23 : vector<8x128xf32>
    %cst_10 = arith.constant 0.000000e+00 : f32
    %25 = vector.broadcast %cst_10 : f32 to vector<8x1xf32>
    %26 = arith.subf %25, %4 : vector<8x1xf32>
    %cst_11 = arith.constant 9.99999993E-9 : f32
    %27 = vector.broadcast %cst_11 : f32 to vector<8x1xf32>
    %28 = arith.addf %5, %27 : vector<8x1xf32>
    %29 = math.log %28 : vector<8x1xf32>
    %30 = arith.mulf %26, %29 : vector<8x1xf32>
    %31 = tpu.iota {dimensions = array<i32: 2>} : vector<1x1x128xi32>
    %c0_i32 = arith.constant 0 : i32
    %32 = vector.broadcast %c0_i32 : i32 to vector<1x1x128xi32>
    %33 = arith.cmpi eq, %31, %32 : vector<1x1x128xi32>
    %34 = vector.shape_cast %24 : vector<8x128xf32> to vector<1x8x128xf32>
    %cst_12 = arith.constant dense<0.000000e+00> : vector<1xf32>
    %35 = vector.multi_reduction <add>, %34, %cst_12 [1, 2] : vector<1x8x128xf32> to vector<1xf32>
    %36 = vector.shape_cast %35 : vector<1xf32> to vector<1x1x1xf32>
    %37 = vector.extract %36[0, 0, 0] : f32 from vector<1x1x1xf32>
    %cst_13 = arith.constant 0.000000e+00 : f32
    %38 = vector.broadcast %37 : f32 to vector<1x1x128xf32>
    %39 = vector.broadcast %cst_13 : f32 to vector<1x1x128xf32>
    %40 = arith.select %33, %38, %39 : vector<1x1x128xi1>, vector<1x1x128xf32>
    %c1_i32 = arith.constant 1 : i32
    %41 = vector.broadcast %c1_i32 : i32 to vector<1x1x128xi32>
    %42 = arith.cmpi eq, %31, %41 : vector<1x1x128xi32>
    %43 = vector.shape_cast %1 : vector<8x128xf32> to vector<1x8x128xf32>
    %cst_14 = arith.constant dense<0.000000e+00> : vector<1xf32>
    %44 = vector.multi_reduction <add>, %43, %cst_14 [1, 2] : vector<1x8x128xf32> to vector<1xf32>
    %45 = vector.shape_cast %44 : vector<1xf32> to vector<1x1x1xf32>
    %46 = vector.extract %45[0, 0, 0] : f32 from vector<1x1x1xf32>
    %cst_15 = arith.constant 0.000000e+00 : f32
    %47 = vector.broadcast %46 : f32 to vector<1x1x128xf32>
    %48 = vector.broadcast %cst_15 : f32 to vector<1x1x128xf32>
    %49 = arith.select %42, %47, %48 : vector<1x1x128xi1>, vector<1x1x128xf32>
    %50 = arith.addf %40, %49 : vector<1x1x128xf32>
    %c2_i32 = arith.constant 2 : i32
    %51 = vector.broadcast %c2_i32 : i32 to vector<1x1x128xi32>
    %52 = arith.cmpi eq, %31, %51 : vector<1x1x128xi32>
    %53 = vector.shape_cast %30 : vector<8x1xf32> to vector<1x8x1xf32>
    %cst_16 = arith.constant dense<0.000000e+00> : vector<1xf32>
    %54 = vector.multi_reduction <add>, %53, %cst_16 [1, 2] : vector<1x8x1xf32> to vector<1xf32>
    %55 = vector.shape_cast %54 : vector<1xf32> to vector<1x1x1xf32>
    %56 = vector.extract %55[0, 0, 0] : f32 from vector<1x1x1xf32>
    %cst_17 = arith.constant 0.000000e+00 : f32
    %57 = vector.broadcast %56 : f32 to vector<1x1x128xf32>
    %58 = vector.broadcast %cst_17 : f32 to vector<1x1x128xf32>
    %59 = arith.select %52, %57, %58 : vector<1x1x128xi1>, vector<1x1x128xf32>
    %60 = arith.addf %50, %59 : vector<1x1x128xf32>
    %c3_i32 = arith.constant 3 : i32
    %61 = vector.broadcast %c3_i32 : i32 to vector<1x1x128xi32>
    %62 = arith.cmpi eq, %31, %61 : vector<1x1x128xi32>
    %63 = vector.shape_cast %4 : vector<8x1xf32> to vector<1x8x1xf32>
    %cst_18 = arith.constant dense<0.000000e+00> : vector<1xf32>
    %64 = vector.multi_reduction <add>, %63, %cst_18 [1, 2] : vector<1x8x1xf32> to vector<1xf32>
    %65 = vector.shape_cast %64 : vector<1xf32> to vector<1x1x1xf32>
    %66 = vector.extract %65[0, 0, 0] : f32 from vector<1x1x1xf32>
    %cst_19 = arith.constant 0.000000e+00 : f32
    %67 = vector.broadcast %66 : f32 to vector<1x1x128xf32>
    %68 = vector.broadcast %cst_19 : f32 to vector<1x1x128xf32>
    %69 = arith.select %62, %67, %68 : vector<1x1x128xi1>, vector<1x1x128xf32>
    %70 = arith.addf %60, %69 : vector<1x1x128xf32>
    %c0_20 = arith.constant 0 : index
    %c0_21 = arith.constant 0 : index
    %c0_22 = arith.constant 0 : index
    %71 = vector.load %arg5[%c0_20, %c0_21, %c0_22] : memref<1x1x128xf32, #tpu.memory_space<vmem>>, vector<1x1x128xf32>
    tpu.vector_store %arg5[%c0_20, %c0_21, %c0_22], %70 {strides = array<i32>} : memref<1x1x128xf32, #tpu.memory_space<vmem>>, vector<1x1x128xf32>,
    return
  }
  func.func @transform_0(%arg0: i32) -> (i32, i32) {
    %c0_i32 = arith.constant 0 : i32
    %c0_i32_0 = arith.constant 0 : i32
    return %arg0, %c0_i32 : i32, i32
  }
  func.func @transform_1(%arg0: i32) -> (i32, i32) {
    %c0_i32 = arith.constant 0 : i32
    %c0_i32_0 = arith.constant 0 : i32
    return %arg0, %c0_i32 : i32, i32
  }
  func.func @transform_2(%arg0: i32) -> (i32, i32) {
    %c0_i32 = arith.constant 0 : i32
    %c0_i32_0 = arith.constant 0 : i32
    return %arg0, %c0_i32 : i32, i32
  }
  func.func @transform_3(%arg0: i32) -> (i32, i32) {
    %c0_i32 = arith.constant 0 : i32
    %c0_i32_0 = arith.constant 0 : i32
    return %arg0, %c0_i32 : i32, i32
  }
  func.func @transform_4(%arg0: i32) -> (i32, i32, i32) {
    %c0_i32 = arith.constant 0 : i32
    %c0_i32_0 = arith.constant 0 : i32
    %c0_i32_1 = arith.constant 0 : i32
    return %arg0, %c0_i32, %c0_i32_0 : i32, i32, i32
  }
}

</mosaic_0001>

<llo_original>
// kernel: compute_all.1
$region0: #{compute_all.1}
  #allocation0 [shape = 'u32[]', space=smem, size = 0x4, offset = 0x4, fixed_abs, tag = 'smem constant byte address 0x4 - core index']
  #allocation1 [shape = 'u32[72,128]{1,0:T(1,128)}', space=vmem, size = 0x9000, scoped, tag = 'internal scratch']
  %s0 = inlined_call_operand.vmem [shape: f32[8,128], index: 0, kind: input, shape index: {}]
  %s1 = inlined_call_operand.vmem [shape: f32[8,128], index: 1, kind: input, shape index: {}]
  %s2 = inlined_call_operand.vmem [shape: s32[8,1], index: 2, kind: input, shape index: {}]
  %s3 = inlined_call_operand.vmem [shape: f32[8,2], index: 3, kind: input, shape index: {}]
  %s4 = inlined_call_operand.vmem [shape: f32[1,1,128], index: 4, kind: output, shape index: {}]
  %s5 = sld [smem:[#allocation0]]
  $region26: #{compute_all.1} parent=0
    _
  %s7 = ssub.s32 1, %s5
  %s8 = scalar_select 0, %s7, %s5
  // Predicated region
  $region2: #{compute_all.1} parent=0 // pred_check
    _
  $region3: #{compute_all.1} parent=0 // pred_check_branch
    %10 = sbr.rel (0) target = $region5
  $region4: #{compute_all.1} parent=0 // pred_region
    _
  $region5: #{compute_all.1} parent=0 // pred_fallthru
    _
  // Predicated region
  $region6: #{compute_all.1} parent=0 // pred_check
    _
  $region7: #{compute_all.1} parent=0 // pred_check_branch
    %12 = sbr.rel (0) target = $region9
  $region8: #{compute_all.1} parent=0 // pred_region
    _
  $region9: #{compute_all.1} parent=0 // pred_fallthru
    _
  // Predicated region
  $region10: #{compute_all.1} parent=0 // pred_check
    _
  $region11: #{compute_all.1} parent=0 // pred_check_branch
    %14 = sbr.rel (0) target = $region13
  $region12: #{compute_all.1} parent=0 // pred_region
    _
  $region13: #{compute_all.1} parent=0 // pred_fallthru
    _
  // Predicated region
  $region14: #{compute_all.1} parent=0 // pred_check
    _
  $region15: #{compute_all.1} parent=0 // pred_check_branch
    %16 = sbr.rel (0) target = $region17
  $region16: #{compute_all.1} parent=0 // pred_region
    _
  $region17: #{compute_all.1} parent=0 // pred_fallthru
    _
  %v17 = vld [vmem:[%s0] sm:$0xff]
  %v18 = vld [vmem:[%s1] sm:$0xff]
  %v19 = vld [vmem:[%s2] sm:$0xff]
  %v20 = vld [vmem:[%s3] sm:$0xff]
  %v21 = vlaneseq
  %v22 = vand.u32 %v21, 127
  %23 = vset.pattern.permute.xlu0 0
  %24 = vperm.xlu0 %23, %v19
  %v25 = vpop.permute.xlu0 %24
  %vm26 = vcmp.ge.s32.totalorder %v22, %v25
  %v27 = vsel %vm26, 1.0, 0.0
  %29 = vset.pattern.permute.xlu0 0
  %30 = vperm.xlu0 %29, %v20
  %v31 = vpop.permute.xlu0 %30
  %v33 = vmul.f32 %v27, %v31
  %v34 = vmax.f32 %v17, 0.0
  %v35 = vand.u32 2147483647, %v17
  %v36 = vsub.f32 0.0, %v35
  %v37 = vmul.f32 %v36, 1.442695
  %v38 = vpow.pop %v37
  %v39 = vadd.f32 %v38, 1.0
  %v40 = vlog2.pop %v39
  %v41 = vmul.f32 %v40, 0.6931472
  %v42 = vmul.f32 -0.5, %v38
  %v43 = vadd.f32 %v42, 1.0
  %v44 = vmul.f32 %v43, %v38
  %v45 = vand.u32 2147483647, %v38
  %vm46 = vcmp.lt.f32.partialorder %v45, 0.0004427343
  %v47 = vsel %vm46, %v44, %v41
  %v48 = vadd.f32 %v34, %v47
  %v49 = vmul.f32 %v33, %v17
  %v50 = vsub.f32 %v48, %v49
  %v51 = vmul.f32 %v18, %v50
  %v52 = vsub.f32 0.0, %v20
  %v53 = vadd.f32 %v20, 1e-08
  %v54 = vlog2.pop %v53
  %v55 = vmul.f32 %v54, 0.6931472
  %57 = vrot.lane.b32.xlu0 %v55, 127
  %v58 = vpop.permute.xlu0 %57
  %v60 = vmul.f32 %v52, %v58
  %vm61 = vcmp.eq.s32.totalorder %v22, 0
  %62 = vadd.xlane.f32.xlu0 %v51
  %v63 = vpop.xlane.xlu0 %62
  %v64 = vrot.slane %v63, 4
  %v65 = vadd.f32 %v63, %v64
  %v66 = vrot.slane %v65, 2
  %v67 = vadd.f32 %v65, %v66
  %v68 = vrot.slane %v67, 1
  %v69 = vadd.f32 %v67, %v68
  %s70 = vtos %v69
  %v71 = vstv %s70
  %v72 = vsel %vm61, %v71, 0.0
  %vm73 = vcmp.eq.s32.totalorder %v22, 1
  %74 = vadd.xlane.f32.xlu0 %v18
  %v75 = vpop.xlane.xlu0 %74
  %v76 = vrot.slane %v75, 4
  %v77 = vadd.f32 %v75, %v76
  %v78 = vrot.slane %v77, 2
  %v79 = vadd.f32 %v77, %v78
  %v80 = vrot.slane %v79, 1
  %v81 = vadd.f32 %v79, %v80
  %s82 = vtos %v81
  %v83 = vstv %s82
  %v84 = vsel %vm73, %v83, 0.0
  %v85 = vadd.f32 %v72, %v84
  %vm86 = vcmp.eq.s32.totalorder %v22, 2
  %vm87 = vcmask 7168
  %v88 = vsel %vm87, %v60, 0.0
  %89 = vadd.xlane.f32.xlu0 %v88
  %v90 = vpop.xlane.xlu0 %89
  %v91 = vrot.slane %v90, 4
  %v92 = vadd.f32 %v90, %v91
  %v93 = vrot.slane %v92, 2
  %v94 = vadd.f32 %v92, %v93
  %v95 = vrot.slane %v94, 1
  %v96 = vadd.f32 %v94, %v95
  %s97 = vtos %v96
  %v98 = vstv %s97
  %v99 = vsel %vm86, %v98, 0.0
  %v100 = vadd.f32 %v85, %v99
  %vm101 = vcmp.eq.s32.totalorder %v22, 3
  %v102 = vsel %vm87, %v20, 0.0
  %103 = vadd.xlane.f32.xlu0 %v102
  %v104 = vpop.xlane.xlu0 %103
  %v105 = vrot.slane %v104, 4
  %v106 = vadd.f32 %v104, %v105
  %v107 = vrot.slane %v106, 2
  %v108 = vadd.f32 %v106, %v107
  %v109 = vrot.slane %v108, 1
  %v110 = vadd.f32 %v108, %v109
  %s111 = vtos %v110
  %v112 = vstv %s111
  %v113 = vsel %vm101, %v112, 0.0
  %v114 = vadd.f32 %v100, %v113
  %115 = vst [vmem:[%s4] sm:$0x1] %v114
  // Predicated region
  $region18: #{compute_all.1} parent=0 // pred_check
    _
  $region19: #{compute_all.1} parent=0 // pred_check_branch
    %117 = sbr.rel (0) target = $region21
  $region20: #{compute_all.1} parent=0 // pred_region
    _
  $region21: #{compute_all.1} parent=0 // pred_fallthru
    _
  // Predicated region
  $region22: #{compute_all.1} parent=0 // pred_check
    _
  $region23: #{compute_all.1} parent=0 // pred_check_branch
    %119 = sbr.rel (0) target = $region25
  $region24: #{compute_all.1} parent=0 // pred_region
    _
  $region25: #{compute_all.1} parent=0 // pred_fallthru
    _

</llo_original>
